<compile_context>
chip_gen: v5e
topology: v5e:2x2
jax: 0.10.0
libtpu: 0.0.40
codegen_flags: <defaults>
</compile_context>

<pallas_src>
import math

import jax
import jax.numpy as jnp
from jax.experimental import pallas as pl
from jax.experimental.pallas import tpu as pltpu

_LANE = 128
_SUBLANE = 8
_TARGET_TILE_BYTES = 4 * 1024 * 1024   # ~4 MiB input blocks (≈86% of HBM roofline)
_VMEM_LIMIT_BYTES = 32 << 20           # explicit: (in + out) x 2 buffers ≤ ~24 MiB
_MIN_PALLAS_BYTES = 256 * 1024         # below this, a fused XLA elementwise op wins


def _mod_relu_kernel(x_ref, b_ref, o_ref):
    # b_ref is (1, w); leave the row broadcast to the compiler.
    x = jnp.abs(x_ref[...]).astype(o_ref.dtype)
    o_ref[...] = jnp.maximum(x + b_ref[...], 0).astype(o_ref.dtype)


def _mod_relu_jnp(x, b, out_dtype):
    return jnp.maximum(jnp.abs(x).astype(out_dtype) + b.astype(out_dtype), 0)


def mod_relu(x, b, *, min_pallas_bytes=_MIN_PALLAS_BYTES):
    """ReLU(|x| + b), b broadcast over the last dim of x (matches mod_relu.forward)."""
    orig_shape = x.shape
    f = orig_shape[-1]
    assert b.shape == (f,), f"b must have shape ({f},), got {b.shape}"
    out_dtype = jnp.promote_types(x.dtype, b.dtype)  # PyTorch-style promotion

    rows = 1
    for d in orig_shape[:-1]:
        rows *= d

    # Tiny inputs: skip the custom call entirely.
    if x.size * x.dtype.itemsize < min_pallas_bytes:
        return _mod_relu_jnp(x, b, out_dtype)

    # Fuse `rep` consecutive feature-rows so the working last dim
    # w = lcm(f, 128) is lane-dense (unmasked vst).
    rep = _LANE // math.gcd(f, _LANE)
    w = f * rep
    n_main = (rows // rep) * rep
    if n_main == 0:
        return _mod_relu_jnp(x, b, out_dtype)

    b_c = b.astype(out_dtype)
    x2d = x.reshape(rows, f)

    rows_w = n_main // rep
    main = x2d[:n_main].reshape(rows_w, w)        # contiguous -> pure reshape
    b_w = jnp.tile(b_c, rep).reshape(1, w)        # tiny one-time tile of the bias

    # Row-block sized for ~4 MiB of input; multiple of 8 sublanes, or the full
    # row extent when the slab is short (full-extent blocks are exempt from
    # the (8, 128) divisibility rule).
    bytes_per_row = w * x.dtype.itemsize
    tile_r = max(_SUBLANE,
                 (_TARGET_TILE_BYTES // max(bytes_per_row, 1)) // _SUBLANE * _SUBLANE)
    if tile_r >= rows_w:
        tile_r = rows_w

    grid = (pl.cdiv(rows_w, tile_r),)

    n_elems = rows_w * w
    out_itemsize = jnp.dtype(out_dtype).itemsize
    cost = pl.CostEstimate(
        flops=3 * n_elems,                        # abs, add, max per element
        transcendentals=0,
        bytes_accessed=n_elems * (x.dtype.itemsize + out_itemsize) + w * out_itemsize,
    )

    out_main = pl.pallas_call(
        _mod_relu_kernel,
        out_shape=jax.ShapeDtypeStruct((rows_w, w), out_dtype),
        grid=grid,
        in_specs=[
            pl.BlockSpec((tile_r, w), lambda i: (i, 0)),   # x row-tiles
            pl.BlockSpec((1, w), lambda i: (0, 0)),        # bias, resident every step
        ],
        out_specs=pl.BlockSpec((tile_r, w), lambda i: (i, 0)),
        compiler_params=pltpu.CompilerParams(
            dimension_semantics=("parallel",),             # independent row tiles
            vmem_limit_bytes=_VMEM_LIMIT_BYTES,
        ),
        cost_estimate=cost,
    )(main, b_w)

    if n_main == rows:
        return out_main.reshape(orig_shape)

    # Ragged tail: fewer than `rep` rows (< w elements) -> negligible traffic.
    tail = _mod_relu_jnp(x2d[n_main:], b, out_dtype)
    out2d = jnp.concatenate([out_main.reshape(n_main, f), tail], axis=0)
    return out2d.reshape(orig_shape)


def mod_relu_ref(x, b):
    out_dtype = jnp.promote_types(x.dtype, b.dtype)
    return jnp.maximum(jnp.abs(x).astype(out_dtype) + b.astype(out_dtype), 0)


if __name__ == "__main__":
    key = jax.random.PRNGKey(0)
    ok = True

    def init_b(k, in_features):
        # 2 * (U[0,1) - 0.5) / sqrt(in_features), matching the PyTorch module init.
        return (2.0 * (jax.random.uniform(k, (in_features,), dtype=jnp.float32) - 0.5)
                / math.sqrt(in_features))

    cases = [
        # (shape, dtype, min_pallas_bytes)
        ((2, 8, 32),     jnp.float32,  0),                 # small, fused lane-dense, no tail
        ((2, 4, 16, 16), jnp.float32,  0),                 # small, rep=8 fusion, no tail
        ((3, 5, 32),     jnp.float32,  0),                 # ragged rows -> kernel + jnp tail
        ((2, 8, 32),     jnp.float32,  _MIN_PALLAS_BYTES), # short-circuit (plain jnp) path
        ((4, 2048, 160), jnp.float32,  0),                 # multi-block grid, ragged last block
        ((2, 512, 256),  jnp.bfloat16, 0),                 # low-precision x, fp32-bias promotion
    ]

    for shape, dtype, thresh in cases:
        key, kx, kb = jax.random.split(key, 3)
        x = jax.random.normal(kx, shape, dtype=dtype)
        b = init_b(kb, shape[-1])

        out = jax.block_until_ready(mod_relu(x, b, min_pallas_bytes=thresh))
        ref = mod_relu_ref(x, b)

        if out.shape != ref.shape or out.dtype != ref.dtype:
            ok = False
        elif not jnp.allclose(out, ref, atol=1e-6, rtol=1e-6):
            ok = False

    if ok:
        print("KERNEL_OK")
</pallas_src>

<mosaic_0001>
module attributes {stable_mosaic.version = 11 : i64} {
  func.func @_mod_relu_kernel(%arg0: i32, %arg1: memref<4x128xf32, #tpu.memory_space<vmem>>, %arg2: memref<1x128xf32, #tpu.memory_space<vmem>>, %arg3: memref<4x128xf32, #tpu.memory_space<vmem>>) attributes {dimension_semantics = [#tpu.dimension_semantics<parallel>], iteration_bounds = array<i64: 1>, scalar_prefetch = 0 : i64, scratch_operands = 0 : i64, tpu.core_type = #tpu.core_type<tc>, window_params = [{transform_indices = @transform_0, window_bounds = array<i64: 4, 128>}, {pipeline_mode = #tpu.pipeline_mode<synchronous>, transform_indices = @transform_1, window_bounds = array<i64: 1, 128>}, {transform_indices = @transform_2, window_bounds = array<i64: 4, 128>}]} {
    %c0 = arith.constant 0 : index
    %c0_0 = arith.constant 0 : index
    %0 = vector.load %arg1[%c0, %c0_0] : memref<4x128xf32, #tpu.memory_space<vmem>>, vector<4x128xf32>
    %1 = math.absf %0 : vector<4x128xf32>
    %c0_1 = arith.constant 0 : index
    %c0_2 = arith.constant 0 : index
    %2 = vector.load %arg2[%c0_1, %c0_2] : memref<1x128xf32, #tpu.memory_space<vmem>>, vector<1x128xf32>
    %3 = vector.broadcast %2 : vector<1x128xf32> to vector<4x128xf32>
    %4 = arith.addf %1, %3 : vector<4x128xf32>
    %cst = arith.constant 0.000000e+00 : f32
    %5 = vector.broadcast %cst : f32 to vector<4x128xf32>
    %6 = arith.maximumf %4, %5 : vector<4x128xf32>
    %c0_3 = arith.constant 0 : index
    %c0_4 = arith.constant 0 : index
    %7 = vector.load %arg3[%c0_3, %c0_4] : memref<4x128xf32, #tpu.memory_space<vmem>>, vector<4x128xf32>
    tpu.vector_store %arg3[%c0_3, %c0_4], %6 {strides = array<i32>} : memref<4x128xf32, #tpu.memory_space<vmem>>, vector<4x128xf32>,
    return
  }
  func.func @transform_0(%arg0: i32) -> (i32, i32) {
    %c0_i32 = arith.constant 0 : i32
    %c0_i32_0 = arith.constant 0 : i32
    return %arg0, %c0_i32 : i32, i32
  }
  func.func @transform_1(%arg0: i32) -> (i32, i32) {
    %c0_i32 = arith.constant 0 : i32
    %c0_i32_0 = arith.constant 0 : i32
    %c0_i32_1 = arith.constant 0 : i32
    return %c0_i32, %c0_i32_0 : i32, i32
  }
  func.func @transform_2(%arg0: i32) -> (i32, i32) {
    %c0_i32 = arith.constant 0 : i32
    %c0_i32_0 = arith.constant 0 : i32
    return %arg0, %c0_i32 : i32, i32
  }
}

</mosaic_0001>

<llo_original>
// kernel: tpu_custom_call.1
$region0: #{tpu_custom_call.1}
  #allocation0 [shape = 'u32[]', space=smem, size = 0x4, offset = 0x4, fixed_abs, tag = 'smem constant byte address 0x4 - core index']
  #allocation1 [shape = 'u32[72,128]{1,0:T(1,128)}', space=vmem, size = 0x9000, scoped, tag = 'internal scratch']
  %s0 = inlined_call_operand.hbm [shape: f32[4,128], index: 0, kind: input, shape index: {}]
  %s1 = inlined_call_operand.hbm [shape: f32[1,128], index: 1, kind: input, shape index: {}]
  %s2 = inlined_call_operand.hbm [shape: f32[4,128], index: 2, kind: output, shape index: {}]
  %s3 = sld [smem:[#allocation0]]
  $region26: #{tpu_custom_call.1} parent=0
    _
  %s5 = ssub.s32 1, %s3
  %s6 = scalar_select 0, %s5, %s3
  $region1: #{tpu_custom_call.1} parent=0
    #allocation2 [shape = 'u8[2048]{0}', space=vmem, size = 0x800, scoped, tag = 'input window, operand 0, single buffered']
    #allocation3 [shape = 's32[1]{0}', space=sflag, size = 0x4, scoped, tag = 'scoped memory for tpu_custom_call.1']
    #allocation4 [shape = 's32[1]{0}', space=sflag, size = 0x4, scoped, tag = 'scoped memory for tpu_custom_call.1']
    #allocation5 [shape = 'u8[512]{0}', space=vmem, size = 0x400, scoped, tag = 'input window, operand 1, single buffered']
    #allocation6 [shape = 's32[1]{0}', space=sflag, size = 0x4, scoped, tag = 'scoped memory for tpu_custom_call.1']
    #allocation7 [shape = 'u8[2048]{0}', space=vmem, size = 0x800, scoped, tag = 'output window, operand 0, single buffered']
    %7 = vsyncpa [#allocation3], 0
    %8 = vsyncpa [#allocation6], 0
    %9 = vsyncpa [#allocation4], 0
    // Predicated region
    $region2: #{tpu_custom_call.1} parent=1 // pred_check
      _
    $region3: #{tpu_custom_call.1} parent=1 // pred_check_branch
      %11 = sbr.rel (0) target = $region5
    $region4: #{tpu_custom_call.1} parent=1 // pred_region
      %13 = vsyncadd [#allocation3], 0
      %s15 = sshll.u32 %s0, 4
      %s16 = int_to_ptr.hbm [resolvable:$true] %s15
      %s17 = sshll.u32 [#allocation2], 4
      %s18 = int_to_ptr.vmem [resolvable:$true] %s17
      %20 = dma.hbm_to_vmem [thread:$0]  %s16, 64, %s18, [#allocation3]
    $region5: #{tpu_custom_call.1} parent=1 // pred_fallthru
      _
    // Predicated region
    $region6: #{tpu_custom_call.1} parent=1 // pred_check
      _
    $region7: #{tpu_custom_call.1} parent=1 // pred_check_branch
      %22 = sbr.rel (0) target = $region9
    $region8: #{tpu_custom_call.1} parent=1 // pred_region
      %24 = vsyncadd [#allocation6], 0
      %s26 = sshll.u32 %s1, 4
      %s27 = int_to_ptr.hbm [resolvable:$true] %s26
      %s28 = sshll.u32 [#allocation5], 4
      %s29 = int_to_ptr.vmem [resolvable:$true] %s28
      %31 = dma.hbm_to_vmem [thread:$0]  %s27, 16, %s29, [#allocation6]
    $region9: #{tpu_custom_call.1} parent=1 // pred_fallthru
      _
    // Predicated region
    $region10: #{tpu_custom_call.1} parent=1 // pred_check
      _
    $region11: #{tpu_custom_call.1} parent=1 // pred_check_branch
      %33 = sbr.rel (0) target = $region13
    $region12: #{tpu_custom_call.1} parent=1 // pred_region
      %35 = dma.done [#allocation3], 64
    $region13: #{tpu_custom_call.1} parent=1 // pred_fallthru
      _
    // Predicated region
    $region14: #{tpu_custom_call.1} parent=1 // pred_check
      _
    $region15: #{tpu_custom_call.1} parent=1 // pred_check_branch
      %37 = sbr.rel (0) target = $region17
    $region16: #{tpu_custom_call.1} parent=1 // pred_region
      %39 = dma.done [#allocation6], 16
    $region17: #{tpu_custom_call.1} parent=1 // pred_fallthru
      _
    %v40 = vld [vmem:[#allocation2] sm:$0xf]
    %v41 = vand.u32 2147483647, %v40
    %v42 = vld [vmem:[#allocation5] sm:$0x1]
    %v44 = vperm.slane %v42, 0
    %v46 = vadd.f32 %v41, %v44
    %v47 = vmax.f32 %v46, 0.0
    %48 = vst [vmem:[#allocation7] sm:$0xf] %v47
    // Predicated region
    $region18: #{tpu_custom_call.1} parent=1 // pred_check
      _
    $region19: #{tpu_custom_call.1} parent=1 // pred_check_branch
      %50 = sbr.rel (0) target = $region21
    $region20: #{tpu_custom_call.1} parent=1 // pred_region
      %52 = vsyncadd [#allocation4], 0
      %s54 = sshll.u32 [#allocation7], 4
      %s55 = int_to_ptr.vmem [resolvable:$true] %s54
      %s56 = sshll.u32 %s2, 4
      %s57 = int_to_ptr.hbm [resolvable:$true] %s56
      %59 = dma.vmem_to_hbm [thread:$0]  %s55, 64, %s57, [#allocation4]
    $region21: #{tpu_custom_call.1} parent=1 // pred_fallthru
      _
    // Predicated region
    $region22: #{tpu_custom_call.1} parent=1 // pred_check
      _
    $region23: #{tpu_custom_call.1} parent=1 // pred_check_branch
      %61 = sbr.rel (0) target = $region25
    $region24: #{tpu_custom_call.1} parent=1 // pred_region
      %63 = dma.done [#allocation4], 64
    $region25: #{tpu_custom_call.1} parent=1 // pred_fallthru
      _
    %64 = vsyncpa [#allocation3], 1
    %65 = vsyncpa [#allocation6], 1
    %66 = vsyncpa [#allocation4], 1

</llo_original>
